<compile_context>
chip_gen: v7x
topology: tpu7x:2x2x1
jax: 0.10.0
libtpu: 0.0.40
codegen_flags: <defaults>
</compile_context>

<pallas_src>
import jax
import jax.numpy as jnp
from jax.experimental import pallas as pl
from jax.experimental.pallas import tpu as pltpu


# ----------------------- host-side helper matrices -----------------------
def _conv_band_matrix(T, w):
    """C[t, s] = w[s - t + 2] if |s - t| <= 2 else 0  (Conv kernel 5, padding 2)."""
    t = jnp.arange(T)[:, None]
    s = jnp.arange(T)[None, :]
    k = s - t + 2
    valid = (k >= 0) & (k <= 4)
    return jnp.where(valid, w[jnp.clip(k, 0, 4)], 0.0).astype(jnp.float32)


def _pool_selectors(T):
    """E[i,j]=1 iff j==2i ; O[i,j]=1 iff j==2i+1  (MaxPool kernel 2, stride 2)."""
    i = jnp.arange(T // 2)[:, None]
    j = jnp.arange(T)[None, :]
    even = (j == 2 * i).astype(jnp.float32)
    odd = (j == 2 * i + 1).astype(jnp.float32)
    return even, odd


# ----------------------- Pallas kernel: whole temporal module, one shot ---------------
def _stf2d_kernel(x_ref, m1_ref, m2_ref, b_ref, o_ref):
    x = x_ref[...]                                   # (T, B*V)  lane-dense RHS
    b1 = b_ref[0]                                    # SMEM scalar
    b2 = b_ref[1]                                    # SMEM scalar

    # stage 1: conv(5, pad 2) + maxpool(2)
    #   one (T,T)@(T,N) matmul; top half rows = even-pool selection, bottom = odd.
    y1 = jnp.dot(m1_ref[...], x, preferred_element_type=jnp.float32)   # (T, N)
    h1 = y1.shape[0] // 2
    p1 = jnp.maximum(y1[:h1], y1[h1:]) + b1                            # (T/2, N)

    # stage 2: conv(5, pad 2) + maxpool(2)
    y2 = jnp.dot(m2_ref[...], p1, preferred_element_type=jnp.float32)  # (T/2, N)
    h2 = y2.shape[0] // 2
    out = jnp.maximum(y2[:h2], y2[h2:]) + b2                           # (T/4, N)

    o_ref[...] = out.astype(o_ref.dtype)


# ----------------------- wrapper -----------------------
@jax.jit
def stf2d_forward(x, conv1_w, conv1_b, conv2_w, conv2_b):
    """x: (B, T, V) float32; conv*_w: (5,); conv*_b: scalar.  Returns (B, T//4, V)."""
    B, T, V = x.shape
    assert T % 4 == 0, "demo assumes T divisible by 4 (PyTorch MaxPool floors otherwise)"
    N = B * V

    # pool*conv merged matrices (even rows stacked on top of odd rows)
    c1 = _conv_band_matrix(T, conv1_w)               # (T, T)
    c2 = _conv_band_matrix(T // 2, conv2_w)          # (T/2, T/2)
    e1, o1 = _pool_selectors(T)
    e2, o2 = _pool_selectors(T // 2)
    m1 = jnp.concatenate([e1 @ c1, o1 @ c1], axis=0)         # (T, T)
    m2 = jnp.concatenate([e2 @ c2, o2 @ c2], axis=0)         # (T/2, T/2)
    biases = jnp.stack([jnp.asarray(conv1_b, jnp.float32),
                        jnp.asarray(conv2_b, jnp.float32)])  # (2,) -> SMEM

    # fold batch into the lane axis: (B, T, V) -> (T, B*V)
    x2 = jnp.transpose(x, (1, 0, 2)).reshape(T, N)

    flops = 2 * T * T * N + 2 * (T // 2) * (T // 2) * N
    bytes_accessed = 4 * (T * N + T * T + (T // 2) * (T // 2) + (T // 4) * N + 2)

    out2 = pl.pallas_call(
        _stf2d_kernel,
        out_shape=jax.ShapeDtypeStruct((T // 4, N), x.dtype),
        in_specs=[
            pl.BlockSpec(memory_space=pltpu.MemorySpace.VMEM),   # x2 (T, B*V)
            pl.BlockSpec(memory_space=pltpu.MemorySpace.VMEM),   # M1 (T, T)
            pl.BlockSpec(memory_space=pltpu.MemorySpace.VMEM),   # M2 (T/2, T/2)
            pl.BlockSpec(memory_space=pltpu.MemorySpace.SMEM),   # biases (2,)
        ],
        out_specs=pl.BlockSpec(memory_space=pltpu.MemorySpace.VMEM),
        cost_estimate=pl.CostEstimate(flops=flops, transcendentals=0,
                                      bytes_accessed=bytes_accessed),
    )(x2, m1, m2, biases)

    # (T/4, B*V) -> (B, T/4, V)
    return jnp.transpose(out2.reshape(T // 4, B, V), (1, 0, 2))


# ----------------------- pure-JAX reference (correctness check) -----------------------
def _ref_forward(x, w1, b1, w2, b2):
    def conv_t(h, w, b):
        T = h.shape[1]
        hp = jnp.pad(h, ((0, 0), (2, 2), (0, 0)))
        return sum(w[k] * hp[:, k:k + T, :] for k in range(5)) + b

    def pool_t(h):
        B, T, V = h.shape
        return h[:, :(T // 2) * 2, :].reshape(B, T // 2, 2, V).max(axis=2)

    h = pool_t(conv_t(x, w1, b1))
    h = pool_t(conv_t(h, w2, b2))
    return h


# ----------------------- main -----------------------
if __name__ == "__main__":
    B, T, V = 2, 16, 128   # use_feat=True: x is (B, T, V) features

    key = jax.random.PRNGKey(0)
    k_x, k_w1, k_b1, k_w2, k_b2 = jax.random.split(key, 5)

    x = jax.random.normal(k_x, (B, T, V), jnp.float32)
    bound = 1.0 / jnp.sqrt(5.0)   # PyTorch Conv2d(1,1,(5,1)) init bound = 1/sqrt(fan_in)
    conv1_w = jax.random.uniform(k_w1, (5,), jnp.float32, -bound, bound)
    conv1_b = jax.random.uniform(k_b1, (), jnp.float32, -bound, bound)
    conv2_w = jax.random.uniform(k_w2, (5,), jnp.float32, -bound, bound)
    conv2_b = jax.random.uniform(k_b2, (), jnp.float32, -bound, bound)

    out = jax.block_until_ready(stf2d_forward(x, conv1_w, conv1_b, conv2_w, conv2_b))
    assert out.shape == (B, T // 4, V), out.shape

    ref = jax.block_until_ready(_ref_forward(x, conv1_w, conv1_b, conv2_w, conv2_b))
    assert jnp.allclose(out, ref, rtol=1e-5, atol=1e-5), float(jnp.max(jnp.abs(out - ref)))

    print("KERNEL_OK")
</pallas_src>

<mosaic_0001>
module attributes {stable_mosaic.version = 11 : i64} {
  func.func @_stf2d_kernel(%arg0: memref<16x256xf32, #tpu.memory_space<vmem>>, %arg1: memref<16x16xf32, #tpu.memory_space<vmem>>, %arg2: memref<8x8xf32, #tpu.memory_space<vmem>>, %arg3: memref<2xf32, #tpu.memory_space<smem>>, %arg4: memref<4x256xf32, #tpu.memory_space<vmem>>) attributes {dimension_semantics = [], scalar_prefetch = 0 : i64, scratch_operands = 0 : i64, tpu.core_type = #tpu.core_type<tc>} {
    %c0 = arith.constant 0 : index
    %c0_0 = arith.constant 0 : index
    %0 = vector.load %arg0[%c0, %c0_0] : memref<16x256xf32, #tpu.memory_space<vmem>>, vector<16x256xf32>
    %c0_1 = arith.constant 0 : index
    %1 = memref.load %arg3[%c0_1] : memref<2xf32, #tpu.memory_space<smem>>
    %c1 = arith.constant 1 : index
    %2 = memref.load %arg3[%c1] : memref<2xf32, #tpu.memory_space<smem>>
    %c0_2 = arith.constant 0 : index
    %c0_3 = arith.constant 0 : index
    %3 = vector.load %arg1[%c0_2, %c0_3] : memref<16x16xf32, #tpu.memory_space<vmem>>, vector<16x16xf32>
    %cst = arith.constant dense<0.000000e+00> : vector<16x256xf32>
    %4 = tpu.matmul %3, %0, %cst {dimension_numbers = #tpu.dot_dimension_numbers<[1], [0], [0], [1], [0, 0, 1, 1], [], []>} : vector<16x16xf32>, vector<16x256xf32>, vector<16x256xf32> -> vector<16x256xf32>
    %5 = vector.extract_strided_slice %4 {offsets = [0, 0], sizes = [8, 256], strides = [1, 1]} : vector<16x256xf32> to vector<8x256xf32>
    %6 = vector.extract_strided_slice %4 {offsets = [8, 0], sizes = [8, 256], strides = [1, 1]} : vector<16x256xf32> to vector<8x256xf32>
    %7 = arith.maximumf %5, %6 : vector<8x256xf32>
    %8 = vector.broadcast %1 : f32 to vector<8x256xf32>
    %9 = arith.addf %7, %8 : vector<8x256xf32>
    %c0_4 = arith.constant 0 : index
    %c0_5 = arith.constant 0 : index
    %10 = vector.load %arg2[%c0_4, %c0_5] : memref<8x8xf32, #tpu.memory_space<vmem>>, vector<8x8xf32>
    %cst_6 = arith.constant dense<0.000000e+00> : vector<8x256xf32>
    %11 = tpu.matmul %10, %9, %cst_6 {dimension_numbers = #tpu.dot_dimension_numbers<[1], [0], [0], [1], [0, 0, 1, 1], [], []>} : vector<8x8xf32>, vector<8x256xf32>, vector<8x256xf32> -> vector<8x256xf32>
    %12 = vector.extract_strided_slice %11 {offsets = [0, 0], sizes = [4, 256], strides = [1, 1]} : vector<8x256xf32> to vector<4x256xf32>
    %13 = vector.extract_strided_slice %11 {offsets = [4, 0], sizes = [4, 256], strides = [1, 1]} : vector<8x256xf32> to vector<4x256xf32>
    %14 = arith.maximumf %12, %13 : vector<4x256xf32>
    %15 = vector.broadcast %2 : f32 to vector<4x256xf32>
    %16 = arith.addf %14, %15 : vector<4x256xf32>
    %c0_7 = arith.constant 0 : index
    %c0_8 = arith.constant 0 : index
    %17 = vector.load %arg4[%c0_7, %c0_8] : memref<4x256xf32, #tpu.memory_space<vmem>>, vector<4x256xf32>
    tpu.vector_store %arg4[%c0_7, %c0_8], %16 {strides = array<i32>} : memref<4x256xf32, #tpu.memory_space<vmem>>, vector<4x256xf32>,
    return
  }
}

</mosaic_0001>

<llo_original>
// kernel: stf2d_forward.1
$region0: #{stf2d_forward.1}
  #allocation0 [shape = 'u32[]', space=smem, size = 0x4, offset = 0x4, fixed_abs, tag = 'smem constant byte address 0x4 - core index']
  #allocation1 [shape = 'u32[144,128]{1,0:T(1,128)}', space=vmem, size = 0x12000, scoped, tag = 'internal scratch']
  %s0 = inlined_call_operand.vmem [shape: f32[16,256], index: 0, kind: input, shape index: {}]
  %s1 = inlined_call_operand.vmem [shape: f32[16,16], index: 1, kind: input, shape index: {}]
  %s2 = inlined_call_operand.vmem [shape: f32[8,8], index: 2, kind: input, shape index: {}]
  %s3 = inlined_call_operand.vmem [shape: f32[2], index: 3, kind: input, shape index: {}]
  %s4 = inlined_call_operand.hbm [shape: f32[4,256], index: 4, kind: output, shape index: {}]
  %s5 = sld [smem:[#allocation0]]
  $region30: #{stf2d_forward.1} parent=0
    _
  %s7 = ssub.s32 1, %s5
  %s8 = scalar_select 0, %s7, %s5
  $region1: #{stf2d_forward.1} parent=0
    #allocation2 [shape = 'u8[512]{0}', space=smem, size = 0x200, scoped, tag = 'input window, operand 3, single buffered']
    #allocation3 [shape = 's32[1]{0}', space=sflag, size = 0x4, scoped, tag = 'scoped memory for stf2d_forward.1']
    #allocation4 [shape = 's32[1]{0}', space=sflag, size = 0x4, scoped, tag = 'scoped memory for stf2d_forward.1']
    #allocation5 [shape = 'u8[4096]{0}', space=vmem, size = 0x1000, scoped, tag = 'output window, operand 0, single buffered']
    %9 = vsyncpa [#allocation4], 0
    %10 = vsyncpa [#allocation3], 0
    // Predicated region
    $region2: #{stf2d_forward.1} parent=1 // pred_check
      _
    $region3: #{stf2d_forward.1} parent=1 // pred_check_branch
      %12 = sbr.rel (0) target = $region5
    $region4: #{stf2d_forward.1} parent=1 // pred_region
      _
    $region5: #{stf2d_forward.1} parent=1 // pred_fallthru
      _
    // Predicated region
    $region6: #{stf2d_forward.1} parent=1 // pred_check
      _
    $region7: #{stf2d_forward.1} parent=1 // pred_check_branch
      %14 = sbr.rel (0) target = $region9
    $region8: #{stf2d_forward.1} parent=1 // pred_region
      _
    $region9: #{stf2d_forward.1} parent=1 // pred_fallthru
      _
    // Predicated region
    $region10: #{stf2d_forward.1} parent=1 // pred_check
      _
    $region11: #{stf2d_forward.1} parent=1 // pred_check_branch
      %16 = sbr.rel (0) target = $region13
    $region12: #{stf2d_forward.1} parent=1 // pred_region
      _
    $region13: #{stf2d_forward.1} parent=1 // pred_fallthru
      _
    // Predicated region
    $region14: #{stf2d_forward.1} parent=1 // pred_check
      _
    $region15: #{stf2d_forward.1} parent=1 // pred_check_branch
      %18 = sbr.rel (0) target = $region17
    $region16: #{stf2d_forward.1} parent=1 // pred_region
      %s20 = ssub.s32 16, 16
      %21 = vsyncadd [#allocation4], %s20
      %s23 = sshll.u32 %s3, 4
      %s24 = int_to_ptr.vmem [resolvable:$true] %s23
      %26 = dma.vmem_to_smem %s24, 16, [#allocation2], [#allocation4]
    $region17: #{stf2d_forward.1} parent=1 // pred_fallthru
      _
    // Predicated region
    $region18: #{stf2d_forward.1} parent=1 // pred_check
      _
    $region19: #{stf2d_forward.1} parent=1 // pred_check_branch
      %28 = sbr.rel (0) target = $region21
    $region20: #{stf2d_forward.1} parent=1 // pred_region
      %29 = dma.done [#allocation4], 16
    $region21: #{stf2d_forward.1} parent=1 // pred_fallthru
      _
    %30 = sfence
    %v31 = vld [vmem:[%s0] sm:$0xff]
    %v32 = vld [vmem:[%s0 + $0x8] sm:$0xff]
    %v33 = vld [vmem:[%s0 + $0x10] sm:$0xff]
    %v34 = vld [vmem:[%s0 + $0x18] sm:$0xff]
    %s35 = sld [smem:[#allocation2]]
    %s36 = sld [smem:[#allocation2 + $0x1]]
    %v37 = vld [vmem:[%s1] sm:$0xff]
    %v38 = vld [vmem:[%s1 + $0x8] sm:$0xff]
    %vm39 = vcmask 130048
    %v41 = vsel %vm39, %v37, 0
    %v44 = vsel %vm39, %v38, 0
    %46 = vmatprep.subr.mxu0 %v32
    %47 = vmatpush1.msra.mxu0 %v31
    %48 = vmatprep.subr.mxu0 %v34
    %49 = vmatpush1.msra.mxu0 %v33
    %50 = vmatprep.subr.mxu0 0.0
    %51 = vmatpush1.msra.mxu0 0.0
    %52 = vmatprep.subr.mxu0 0.0
    %53 = vmatpush1.msra.mxu0 0.0
    %54 = vmatprep.subr.mxu0 0.0
    %55 = vmatpush1.msra.mxu0 0.0
    %56 = vmatprep.subr.mxu0 0.0
    %57 = vmatpush1.msra.mxu0 0.0
    %58 = vmatprep.subr.mxu0 0.0
    %59 = vmatpush1.msra.mxu0 0.0
    %60 = vmatprep.subr.mxu0 0.0
    %61 = vmatpush1.msra.mxu0 0.0
    %62 = vmatprep.subr.mxu0 0.0
    %63 = vmatpush1.msra.mxu0 0.0
    %64 = vmatprep.subr.mxu0 0.0
    %65 = vmatpush1.msra.mxu0 0.0
    %66 = vmatprep.subr.mxu0 0.0
    %67 = vmatpush1.msra.mxu0 0.0
    %68 = vmatprep.subr.mxu0 0.0
    %69 = vmatpush1.msra.mxu0 0.0
    %70 = vmatprep.subr.mxu0 0.0
    %71 = vmatpush1.msra.mxu0 0.0
    %72 = vmatprep.subr.mxu0 0.0
    %73 = vmatpush1.msra.mxu0 0.0
    %74 = vmatprep.subr.mxu0 0.0
    %75 = vmatpush1.msra.mxu0 0.0
    %76 = vmatprep.subr.mxu0 0.0
    %77 = vmatpush1.msra.mxu0 0.0
    %78 = vmatprep.subr.mxu0 0.0
    %79 = vmatpush1.msra.mxu0 0.0
    %80 = vmatprep.subr.mxu0 0.0
    %81 = vmatpush1.msra.mxu0 0.0
    %82 = vmatprep.subr.mxu0 0.0
    %83 = vmatpush1.msra.mxu0 0.0
    %84 = vmatprep.subr.mxu0 0.0
    %85 = vmatpush1.msra.mxu0 0.0
    %86 = vmatprep.subr.mxu0 0.0
    %87 = vmatpush1.msra.mxu0 0.0
    %88 = vmatprep.subr.mxu0 0.0
    %89 = vmatpush1.msra.mxu0 0.0
    %90 = vmatprep.subr.mxu0 0.0
    %91 = vmatpush1.msra.mxu0 0.0
    %92 = vmatprep.subr.mxu0 0.0
    %93 = vmatpush1.msra.mxu0 0.0
    %94 = vmatprep.subr.mxu0 0.0
    %95 = vmatpush1.msra.mxu0 0.0
    %96 = vmatprep.subr.mxu0 0.0
    %97 = vmatpush1.msra.mxu0 0.0
    %98 = vmatprep.subr.mxu0 0.0
    %99 = vmatpush1.msra.mxu0 0.0
    %100 = vmatprep.subr.mxu0 0.0
    %101 = vmatpush1.msra.mxu0 0.0
    %102 = vmatprep.subr.mxu0 0.0
    %103 = vmatpush1.msra.mxu0 0.0
    %104 = vmatprep.subr.mxu0 0.0
    %105 = vmatpush1.msra.mxu0 0.0
    %106 = vmatprep.subr.mxu0 0.0
    %107 = vmatpush1.msra.mxu0 0.0
    %108 = vmatprep.subr.mxu0 0.0
    %109 = vmatpush1.msra.mxu0 0.0
    %110 = vmatprep.mubr.f32.mxu0 0.0
    %111 = vmatmul.mubr.f32.gmra.mrb[0].mxu0 %v41
    %v112 = vpop.f32.mrb[0].mxu0
    %v113 = vadd.f32 0.0, %v112
    %v114 = vpop.f32.mrb[0].mxu0
    %v115 = vadd.f32 0.0, %v114
    %116 = vmatprep.mubr.f32.mxu0 0.0
    %117 = vmatmul.mubr.f32.gmra.mrb[0].mxu0 %v44
    %v118 = vpop.f32.mrb[0].mxu0
    %v119 = vadd.f32 0.0, %v118
    %v120 = vpop.f32.mrb[0].mxu0
    %v121 = vadd.f32 0.0, %v120
    %122 = vdwg.mxu0
    %v123 = vmax.f32 %v113, %v119
    %v124 = vmax.f32 %v115, %v121
    %v125 = vstv %s35
    %v126 = vadd.f32 %v123, %v125
    %v127 = vadd.f32 %v124, %v125
    %v128 = vld [vmem:[%s2] sm:$0xff]
    %vm129 = vcmask 64512
    %v131 = vsel %vm129, %v128, 0
    %133 = vmatprep.subr.mxu0 %v127
    %134 = vmatpush1.msra.mxu0 %v126
    %135 = vmatprep.subr.mxu0 0.0
    %136 = vmatpush1.msra.mxu0 0.0
    %137 = vmatprep.subr.mxu0 0.0
    %138 = vmatpush1.msra.mxu0 0.0
    %139 = vmatprep.subr.mxu0 0.0
    %140 = vmatpush1.msra.mxu0 0.0
    %141 = vmatprep.subr.mxu0 0.0
    %142 = vmatpush1.msra.mxu0 0.0
    %143 = vmatprep.subr.mxu0 0.0
    %144 = vmatpush1.msra.mxu0 0.0
    %145 = vmatprep.subr.mxu0 0.0
    %146 = vmatpush1.msra.mxu0 0.0
    %147 = vmatprep.subr.mxu0 0.0
    %148 = vmatpush1.msra.mxu0 0.0
    %149 = vmatprep.subr.mxu0 0.0
    %150 = vmatpush1.msra.mxu0 0.0
    %151 = vmatprep.subr.mxu0 0.0
    %152 = vmatpush1.msra.mxu0 0.0
    %153 = vmatprep.subr.mxu0 0.0
    %154 = vmatpush1.msra.mxu0 0.0
    %155 = vmatprep.subr.mxu0 0.0
    %156 = vmatpush1.msra.mxu0 0.0
    %157 = vmatprep.subr.mxu0 0.0
    %158 = vmatpush1.msra.mxu0 0.0
    %159 = vmatprep.subr.mxu0 0.0
    %160 = vmatpush1.msra.mxu0 0.0
    %161 = vmatprep.subr.mxu0 0.0
    %162 = vmatpush1.msra.mxu0 0.0
    %163 = vmatprep.subr.mxu0 0.0
    %164 = vmatpush1.msra.mxu0 0.0
    %165 = vmatprep.subr.mxu0 0.0
    %166 = vmatpush1.msra.mxu0 0.0
    %167 = vmatprep.subr.mxu0 0.0
    %168 = vmatpush1.msra.mxu0 0.0
    %169 = vmatprep.subr.mxu0 0.0
    %170 = vmatpush1.msra.mxu0 0.0
    %171 = vmatprep.subr.mxu0 0.0
    %172 = vmatpush1.msra.mxu0 0.0
    %173 = vmatprep.subr.mxu0 0.0
    %174 = vmatpush1.msra.mxu0 0.0
    %175 = vmatprep.subr.mxu0 0.0
    %176 = vmatpush1.msra.mxu0 0.0
    %177 = vmatprep.subr.mxu0 0.0
    %178 = vmatpush1.msra.mxu0 0.0
    %179 = vmatprep.subr.mxu0 0.0
    %180 = vmatpush1.msra.mxu0 0.0
    %181 = vmatprep.subr.mxu0 0.0
    %182 = vmatpush1.msra.mxu0 0.0
    %183 = vmatprep.subr.mxu0 0.0
    %184 = vmatpush1.msra.mxu0 0.0
    %185 = vmatprep.subr.mxu0 0.0
    %186 = vmatpush1.msra.mxu0 0.0
    %187 = vmatprep.subr.mxu0 0.0
    %188 = vmatpush1.msra.mxu0 0.0
    %189 = vmatprep.subr.mxu0 0.0
    %190 = vmatpush1.msra.mxu0 0.0
    %191 = vmatprep.subr.mxu0 0.0
    %192 = vmatpush1.msra.mxu0 0.0
    %193 = vmatprep.subr.mxu0 0.0
    %194 = vmatpush1.msra.mxu0 0.0
    %195 = vmatprep.subr.mxu0 0.0
    %196 = vmatpush1.msra.mxu0 0.0
    %197 = vmatprep.mubr.f32.mxu0 0.0
    %198 = vmatmul.mubr.f32.gmra.mrb[0].mxu0 %v131
    %v199 = vpop.f32.mrb[0].mxu0
    %v200 = vadd.f32 0.0, %v199
    %v201 = vpop.f32.mrb[0].mxu0
    %v202 = vadd.f32 0.0, %v201
    %203 = vdwg.mxu0
    %v206 = vrot.slane %v200, 4
    %v207 = vrot.slane %v202, 4
    %v210 = vmax.f32 %v200, %v206
    %v211 = vmax.f32 %v202, %v207
    %v212 = vstv %s36
    %v213 = vadd.f32 %v210, %v212
    %v214 = vadd.f32 %v211, %v212
    %v217 = vcombine.low %v213, %v214
    %219 = vst [vmem:[#allocation5] sm:$0xff] %v217
    // Predicated region
    $region22: #{stf2d_forward.1} parent=1 // pred_check
      _
    $region23: #{stf2d_forward.1} parent=1 // pred_check_branch
      %221 = sbr.rel (0) target = $region25
    $region24: #{stf2d_forward.1} parent=1 // pred_region
      %s223 = ssub.s32 128, 128
      %224 = vsyncadd [#allocation3], %s223
      %s226 = sshll.u32 [#allocation5], 4
      %s227 = int_to_ptr.vmem [resolvable:$true] %s226
      %229 = dma.vmem_to_hbm [thread:$0]  %s227, 128, %s4, [#allocation3]
    $region25: #{stf2d_forward.1} parent=1 // pred_fallthru
      _
    // Predicated region
    $region26: #{stf2d_forward.1} parent=1 // pred_check
      _
    $region27: #{stf2d_forward.1} parent=1 // pred_check_branch
      %231 = sbr.rel (0) target = $region29
    $region28: #{stf2d_forward.1} parent=1 // pred_region
      %232 = dma.done [#allocation3], 128
    $region29: #{stf2d_forward.1} parent=1 // pred_fallthru
      _
    %233 = vsyncpa [#allocation3], 1
    %234 = vsyncpa [#allocation4], 1

</llo_original>
